<compile_context>
chip_gen: v7x
topology: tpu7x:2x2x1
jax: 0.10.0
libtpu: 0.0.40
codegen_flags: <defaults>
</compile_context>

<pallas_src>
import functools
import math

import jax
import jax.numpy as jnp
from jax.experimental import pallas as pl
from jax.experimental.pallas import tpu as pltpu


def _attention_kernel(q_ref, k_ref, v_ref, final_ref, lin_ref,
                      m_ref, l_ref, acc_ref, *, scale):
    # Per-step views (packed layout, PP batch elements per 128-lane row):
    #   q_ref:     (TBG, LK)        LK = PP*D
    #   k_ref:     (TT, TBG, LK)
    #   v_ref:     (TT, TBG, LV)    LV = PP*V
    #   final_ref: (T,  TBG, PP)    resident across the T grid axis
    #   lin_ref:   (TBG, LV)
    #   scratch:   m_ref/l_ref (TBG, PP), acc_ref (TBG, LV)
    tt, tbg, lk = k_ref.shape
    lv = v_ref.shape[-1]
    pp = final_ref.shape[-1]
    d = lk // pp
    vd = lv // pp

    t = pl.program_id(1)

    @pl.when(t == 0)
    def _init():
        m_ref[...] = jnp.full_like(m_ref, -jnp.inf)
        l_ref[...] = jnp.zeros_like(l_ref)
        acc_ref[...] = jnp.zeros_like(acc_ref)

    q = q_ref[...]                                   # (TBG, LK)
    k = k_ref[...]                                   # (TT, TBG, LK)
    w = v_ref[...]                                   # (TT, TBG, LV)

    # Segment-sum matrix (LK, PP): seg[a, p] = scale iff lane a belongs to the
    # p-th packed batch element (a in [p*D, (p+1)*D)).  Built with 2-D iota +
    # compares (no integer division) -- a couple of vregs, negligible.
    a_ids = jax.lax.broadcasted_iota(jnp.int32, (lk, pp), 0)
    p_ids = jax.lax.broadcasted_iota(jnp.int32, (lk, pp), 1)
    seg = jnp.where((a_ids >= p_ids * d) & (a_ids < (p_ids + 1) * d),
                    jnp.float32(scale), jnp.float32(0.0))

    # Broadcast matrix (PP, LV): bmat[p, b] = 1 iff value-lane b belongs to
    # packed batch element p (b in [p*V, (p+1)*V)).
    pr_ids = jax.lax.broadcasted_iota(jnp.int32, (pp, lv), 0)
    bl_ids = jax.lax.broadcasted_iota(jnp.int32, (pp, lv), 1)
    bmat = ((bl_ids >= pr_ids * vd) & (bl_ids < (pr_ids + 1) * vd)
            ).astype(jnp.float32)

    # scores[t, g, p] = scale * sum_d q[b, d] * k[t, b, d],  b = g*PP + p.
    # Full-lane-occupancy VPU multiply + MXU segment reduction (no XLU).
    prod = q[None, :, :] * k                                        # (TT, TBG, LK)
    s = jnp.dot(prod.reshape(tt * tbg, lk), seg,
                preferred_element_type=jnp.float32).reshape(tt, tbg, pp)

    # Stage raw (already scaled) scores in the resident final block; they are
    # normalized in place on the last T step.
    start = pl.multiple_of(t * tt, tt)
    final_ref[pl.ds(start, tt)] = s

    # Online softmax (flash) running statistics over the T grid axis.
    m_prev = m_ref[...]
    m_new = jnp.maximum(m_prev, jnp.max(s, axis=0))                 # (TBG, PP)
    alpha = jnp.exp(m_prev - m_new)
    e = jnp.exp(s - m_new[None])                                    # (TT, TBG, PP)
    l_ref[...] = alpha * l_ref[...] + jnp.sum(e, axis=0)
    m_ref[...] = m_new

    # Weighted values: broadcast e to the value lane grouping on the MXU, then
    # accumulate on the VPU at full lane occupancy.
    e_b = jnp.dot(e.reshape(tt * tbg, pp), bmat,
                  preferred_element_type=jnp.float32).reshape(tt, tbg, lv)
    alpha_b = jnp.dot(alpha, bmat, preferred_element_type=jnp.float32)
    acc_ref[...] = alpha_b * acc_ref[...] + jnp.sum(e_b * w, axis=0)

    @pl.when(t == pl.num_programs(1) - 1)
    def _finalize():
        inv_l = pl.reciprocal(l_ref[...], approx=True)              # (TBG, PP)
        probs = jnp.exp(final_ref[...] - m_ref[...][None]) * inv_l[None]
        final_ref[...] = probs
        inv_l_b = jnp.dot(inv_l, bmat, preferred_element_type=jnp.float32)
        lin_ref[...] = (acc_ref[...] * inv_l_b).astype(lin_ref.dtype)


def _round_up(x, m):
    return ((x + m - 1) // m) * m


def _step_vmem_bytes(tb, tt, t_total, lk, lv, pp):
    """Padding-aware VMEM footprint of one grid step (f32), including the x2
    double-buffering Pallas applies to every pipelined input/output block."""
    tbg_p = _round_up(tb // pp, 8)        # sublane padding
    lk_p = _round_up(lk, 128)             # lane padding
    lv_p = _round_up(lv, 128)
    pp_p = _round_up(pp, 128)
    by = 4
    q_blk = tbg_p * lk_p * by
    k_blk = tt * tbg_p * lk_p * by
    v_blk = tt * tbg_p * lv_p * by
    fin_blk = t_total * tbg_p * pp_p * by    # resident scores/final block
    lin_blk = tbg_p * lv_p * by
    scratch = (2 * tbg_p * pp_p + tbg_p * lv_p) * by
    return 2 * (q_blk + k_blk + v_blk + fin_blk + lin_blk) + scratch


def _choose_tiles(b_pad, t_total, d, v, pp):
    """Per-generation tile selection: padded, double-buffered accounting
    against the real VMEM capacity; even grid-step count preferred (v7x)."""
    lk, lv = pp * d, pp * v
    try:
        cap = int(pltpu.get_tpu_info().vmem_capacity_bytes)
    except Exception:
        cap = 64 * 1024 * 1024            # conservative fallback (v7x per-TC)
    # ~35% of physical VMEM for blocks: ~45 MiB on 128 MiB v5e/v6e, ~22 MiB on
    # 64 MiB v7x, clamped to [8, 48] MiB.
    budget = max(8 << 20, min(48 << 20, int(cap * 0.35)))

    tb_min = 8 * pp
    # Sequence tile: keep all of T resident when it fits; otherwise halve
    # (flash accumulation stays exact for any tt | T).
    tt = t_total
    while (tt % 2 == 0 and tt > 8
           and _step_vmem_bytes(tb_min, tt, t_total, lk, lv, pp) > budget):
        tt //= 2

    # Batch tile: largest multiple of 8*PP dividing b_pad that fits the
    # budget; prefer an even number of grid steps so v7x's two TensorCores
    # split the ("parallel",) batch axis evenly.
    cands = [tb for tb in range(tb_min, b_pad + 1, tb_min)
             if b_pad % tb == 0
             and _step_vmem_bytes(tb, tt, t_total, lk, lv, pp) <= budget]
    if not cands:
        cands = [tb_min]
    even = [tb for tb in cands if (b_pad // tb) % 2 == 0]
    tb = max(even) if even else max(cands)

    need = _step_vmem_bytes(tb, tt, t_total, lk, lv, pp)
    vmem_limit = int(min(max(32 << 20, need + (8 << 20)), int(cap * 15 / 16)))
    return tb, tt, vmem_limit


def attention_forward(query, keys, values):
    """query: [B, D], keys: [T, B, D], values: [T, B, V] (float32)."""
    B, D = query.shape
    T, Bk, Dk = keys.shape
    Tv, Bv, V = values.shape
    assert (Bk, Dk) == (B, D) and (Tv, Bv) == (T, B)
    scale = 1.0 / math.sqrt(D)

    # Lane-packing factor: PP batch elements share one 128-lane row.
    if D <= 128 and V <= 128 and 128 % D == 0 and 128 % V == 0:
        pp = min(128 // D, 128 // V)
    else:
        pp = 1   # TODO(synk): pad D/V up to a divisor of 128 to keep packing.
    lk, lv = pp * D, pp * V

    # Pad the batch to the packing/sublane granularity.  Padded rows are
    # zeros -> a harmless uniform softmax that is sliced off below.
    grain = 8 * pp
    b_pad = _round_up(B, grain)
    if b_pad != B:
        pad = b_pad - B
        query = jnp.pad(query, ((0, pad), (0, 0)))
        keys = jnp.pad(keys, ((0, 0), (0, pad), (0, 0)))
        values = jnp.pad(values, ((0, 0), (0, pad), (0, 0)))
    bg = b_pad // pp

    # Free (contiguous-in-HBM) packing reshapes: [*, B, D] -> [*, B/PP, PP*D].
    qp = query.reshape(bg, lk)
    kp = keys.reshape(T, bg, lk)
    vp = values.reshape(T, bg, lv)

    tb, tt, vmem_limit = _choose_tiles(b_pad, T, D, V, pp)
    tbg = tb // pp
    g = b_pad // tb
    nt = T // tt

    kernel = functools.partial(_attention_kernel, scale=scale)

    cost = pl.CostEstimate(
        flops=2 * b_pad * T * (D + V),
        transcendentals=2 * b_pad * T,
        bytes_accessed=4 * (b_pad * D + b_pad * T * (D + V)
                            + b_pad * T + b_pad * V),
    )

    final_pk, lin_pk = pl.pallas_call(
        kernel,
        out_shape=(
            jax.ShapeDtypeStruct((T, bg, pp), jnp.float32),   # softmax (packed)
            jax.ShapeDtypeStruct((bg, lv), jnp.float32),      # linear comb. (packed)
        ),
        grid_spec=pltpu.PrefetchScalarGridSpec(
            num_scalar_prefetch=0,
            grid=(g, nt),
            in_specs=[
                pl.BlockSpec((tbg, lk), lambda i, j: (i, 0)),         # query
                pl.BlockSpec((tt, tbg, lk), lambda i, j: (j, i, 0)),  # keys
                pl.BlockSpec((tt, tbg, lv), lambda i, j: (j, i, 0)),  # values
            ],
            out_specs=[
                pl.BlockSpec((T, tbg, pp), lambda i, j: (0, i, 0)),   # resident over j
                pl.BlockSpec((tbg, lv), lambda i, j: (i, 0)),
            ],
            scratch_shapes=[
                pltpu.VMEM((tbg, pp), jnp.float32),   # running max
                pltpu.VMEM((tbg, pp), jnp.float32),   # running denominator
                pltpu.VMEM((tbg, lv), jnp.float32),   # weighted-value accumulator
            ],
        ),
        compiler_params=pltpu.CompilerParams(
            dimension_semantics=("parallel", "arbitrary"),
            vmem_limit_bytes=vmem_limit,
        ),
        cost_estimate=cost,
    )(qp, kp, vp)

    # Layout plumbing only (contiguous un-pack reshapes + tiny [T,B] transpose,
    # negligible next to K/V traffic).
    final = jnp.transpose(final_pk.reshape(T, b_pad), (1, 0))[:B][:, None, :]
    lin = lin_pk.reshape(b_pad, V)[:B]
    return final, lin


def _reference(query, keys, values):
    B, D = query.shape
    scale = 1.0 / math.sqrt(D)
    q = query[:, None, :]                      # [B,1,D]
    k = jnp.transpose(keys, (1, 2, 0))         # [B,D,T]
    s = jnp.einsum("bod,bdt->bot", q, k) * scale
    final = jax.nn.softmax(s, axis=2)          # [B,1,T]
    v = jnp.transpose(values, (1, 0, 2))       # [B,T,V]
    lin = jnp.einsum("bot,btv->bov", final, v)[:, 0, :]
    return final, lin


if __name__ == "__main__":
    # Small shapes consistent with the module:
    # batch=2, seq=8, query_dim=key_dim=32, value_dim=32
    B, T, D, V = 2, 8, 32, 32
    key = jax.random.PRNGKey(0)
    kq, kk, kv = jax.random.split(key, 3)
    query = jax.random.normal(kq, (B, D), dtype=jnp.float32)
    keys = jax.random.normal(kk, (T, B, D), dtype=jnp.float32)
    values = jax.random.normal(kv, (T, B, V), dtype=jnp.float32)

    final, lin = attention_forward(query, keys, values)
    jax.block_until_ready((final, lin))

    ref_final, ref_lin = _reference(query, keys, values)
    assert final.shape == (B, 1, T) and lin.shape == (B, V)
    # approx=True reciprocal (EUP) is good to ~1e-4 relative; tolerance is
    # comfortably above that.
    assert jnp.allclose(final, ref_final, atol=2e-3, rtol=2e-3)
    assert jnp.allclose(lin, ref_lin, atol=2e-3, rtol=2e-3)

    print("KERNEL_OK")
</pallas_src>

<mosaic_0001>
module attributes {stable_mosaic.version = 11 : i64} {
  func.func @_attention_kernel(%arg0: i32, %arg1: i32, %arg2: memref<8x128xf32, #tpu.memory_space<vmem>>, %arg3: memref<8x8x128xf32, #tpu.memory_space<vmem>>, %arg4: memref<8x8x128xf32, #tpu.memory_space<vmem>>, %arg5: memref<8x8x4xf32, #tpu.memory_space<vmem>>, %arg6: memref<8x128xf32, #tpu.memory_space<vmem>>, %arg7: memref<8x4xf32, #tpu.memory_space<vmem>>, %arg8: memref<8x4xf32, #tpu.memory_space<vmem>>, %arg9: memref<8x128xf32, #tpu.memory_space<vmem>>) attributes {dimension_semantics = [#tpu.dimension_semantics<parallel>, #tpu.dimension_semantics<arbitrary>], iteration_bounds = array<i64: 1, 1>, scalar_prefetch = 0 : i64, scratch_operands = 3 : i64, tpu.core_type = #tpu.core_type<tc>, window_params = [{transform_indices = @transform_0, window_bounds = array<i64: 8, 128>}, {transform_indices = @transform_1, window_bounds = array<i64: 8, 8, 128>}, {transform_indices = @transform_2, window_bounds = array<i64: 8, 8, 128>}, {transform_indices = @transform_3, window_bounds = array<i64: 8, 8, 4>}, {transform_indices = @transform_4, window_bounds = array<i64: 8, 128>}]} {
    %c0_i32 = arith.constant 0 : i32
    %0 = arith.cmpi eq, %arg1, %c0_i32 : i32
    %1 = arith.extui %0 : i1 to i32
    %c0_i32_0 = arith.constant 0 : i32
    %2 = arith.cmpi ne, %1, %c0_i32_0 : i32
    scf.if %2 {
      %cst_35 = arith.constant 0xFF800000 : f32
      %71 = vector.broadcast %cst_35 : f32 to vector<8x4xf32>
      %c0_36 = arith.constant 0 : index
      %c0_37 = arith.constant 0 : index
      %72 = vector.load %arg7[%c0_36, %c0_37] : memref<8x4xf32, #tpu.memory_space<vmem>>, vector<8x4xf32>
      tpu.vector_store %arg7[%c0_36, %c0_37], %71 {strides = array<i32>} : memref<8x4xf32, #tpu.memory_space<vmem>>, vector<8x4xf32>,
      %cst_38 = arith.constant 0.000000e+00 : f32
      %73 = vector.broadcast %cst_38 : f32 to vector<8x4xf32>
      %c0_39 = arith.constant 0 : index
      %c0_40 = arith.constant 0 : index
      %74 = vector.load %arg8[%c0_39, %c0_40] : memref<8x4xf32, #tpu.memory_space<vmem>>, vector<8x4xf32>
      tpu.vector_store %arg8[%c0_39, %c0_40], %73 {strides = array<i32>} : memref<8x4xf32, #tpu.memory_space<vmem>>, vector<8x4xf32>,
      %cst_41 = arith.constant 0.000000e+00 : f32
      %75 = vector.broadcast %cst_41 : f32 to vector<8x128xf32>
      %c0_42 = arith.constant 0 : index
      %c0_43 = arith.constant 0 : index
      %76 = vector.load %arg9[%c0_42, %c0_43] : memref<8x128xf32, #tpu.memory_space<vmem>>, vector<8x128xf32>
      tpu.vector_store %arg9[%c0_42, %c0_43], %75 {strides = array<i32>} : memref<8x128xf32, #tpu.memory_space<vmem>>, vector<8x128xf32>,
    } else {
    }
    %c0 = arith.constant 0 : index
    %c0_1 = arith.constant 0 : index
    %3 = vector.load %arg2[%c0, %c0_1] : memref<8x128xf32, #tpu.memory_space<vmem>>, vector<8x128xf32>
    %c0_2 = arith.constant 0 : index
    %c0_3 = arith.constant 0 : index
    %c0_4 = arith.constant 0 : index
    %4 = vector.load %arg3[%c0_2, %c0_3, %c0_4] : memref<8x8x128xf32, #tpu.memory_space<vmem>>, vector<8x8x128xf32>
    %c0_5 = arith.constant 0 : index
    %c0_6 = arith.constant 0 : index
    %c0_7 = arith.constant 0 : index
    %5 = vector.load %arg4[%c0_5, %c0_6, %c0_7] : memref<8x8x128xf32, #tpu.memory_space<vmem>>, vector<8x8x128xf32>
    %6 = tpu.iota {dimensions = array<i32: 0>} : vector<128x4xi32>
    %7 = tpu.iota {dimensions = array<i32: 1>} : vector<128x4xi32>
    %c32_i32 = arith.constant 32 : i32
    %8 = vector.broadcast %c32_i32 : i32 to vector<128x4xi32>
    %9 = arith.muli %7, %8 : vector<128x4xi32>
    %10 = arith.cmpi sge, %6, %9 : vector<128x4xi32>
    %c1_i32 = arith.constant 1 : i32
    %11 = vector.broadcast %c1_i32 : i32 to vector<128x4xi32>
    %12 = arith.addi %7, %11 : vector<128x4xi32>
    %c32_i32_8 = arith.constant 32 : i32
    %13 = vector.broadcast %c32_i32_8 : i32 to vector<128x4xi32>
    %14 = arith.muli %12, %13 : vector<128x4xi32>
    %15 = arith.cmpi slt, %6, %14 : vector<128x4xi32>
    %16 = arith.andi %10, %15 : vector<128x4xi1>
    %cst = arith.constant 0.176776692 : f32
    %cst_9 = arith.constant 0.000000e+00 : f32
    %17 = vector.broadcast %cst : f32 to vector<128x4xf32>
    %18 = vector.broadcast %cst_9 : f32 to vector<128x4xf32>
    %19 = arith.select %16, %17, %18 : vector<128x4xi1>, vector<128x4xf32>
    %20 = tpu.iota {dimensions = array<i32: 0>} : vector<4x128xi32>
    %21 = tpu.iota {dimensions = array<i32: 1>} : vector<4x128xi32>
    %c32_i32_10 = arith.constant 32 : i32
    %22 = vector.broadcast %c32_i32_10 : i32 to vector<4x128xi32>
    %23 = arith.muli %20, %22 : vector<4x128xi32>
    %24 = arith.cmpi sge, %21, %23 : vector<4x128xi32>
    %c1_i32_11 = arith.constant 1 : i32
    %25 = vector.broadcast %c1_i32_11 : i32 to vector<4x128xi32>
    %26 = arith.addi %20, %25 : vector<4x128xi32>
    %c32_i32_12 = arith.constant 32 : i32
    %27 = vector.broadcast %c32_i32_12 : i32 to vector<4x128xi32>
    %28 = arith.muli %26, %27 : vector<4x128xi32>
    %29 = arith.cmpi slt, %21, %28 : vector<4x128xi32>
    %30 = arith.andi %24, %29 : vector<4x128xi1>
    %31 = arith.extui %30 : vector<4x128xi1> to vector<4x128xi32>
    %32 = arith.sitofp %31 : vector<4x128xi32> to vector<4x128xf32>
    %33 = vector.shape_cast %3 : vector<8x128xf32> to vector<1x8x128xf32>
    %34 = vector.broadcast %33 : vector<1x8x128xf32> to vector<8x8x128xf32>
    %35 = arith.mulf %34, %4 : vector<8x8x128xf32>
    %36 = vector.shape_cast %35 : vector<8x8x128xf32> to vector<64x128xf32>
    %cst_13 = arith.constant dense<0.000000e+00> : vector<64x4xf32>
    %37 = tpu.matmul %36, %19, %cst_13 {dimension_numbers = #tpu.dot_dimension_numbers<[1], [0], [0], [1], [0, 0, 1, 1], [], []>} : vector<64x128xf32>, vector<128x4xf32>, vector<64x4xf32> -> vector<64x4xf32>
    %38 = vector.shape_cast %37 : vector<64x4xf32> to vector<8x8x4xf32>
    %c8_i32 = arith.constant 8 : i32
    %39 = arith.muli %arg1, %c8_i32 : i32
    %40 = tpu.assume_multiple %39, 8 : i32
    %41 = arith.index_cast %40 : i32 to index
    %c0_14 = arith.constant 0 : index
    %c0_15 = arith.constant 0 : index
    %42 = vector.load %arg5[%41, %c0_14, %c0_15] : memref<8x8x4xf32, #tpu.memory_space<vmem>>, vector<8x8x4xf32>
    tpu.vector_store %arg5[%41, %c0_14, %c0_15], %38 {strides = array<i32>} : memref<8x8x4xf32, #tpu.memory_space<vmem>>, vector<8x8x4xf32>,
    %c0_16 = arith.constant 0 : index
    %c0_17 = arith.constant 0 : index
    %43 = vector.load %arg7[%c0_16, %c0_17] : memref<8x4xf32, #tpu.memory_space<vmem>>, vector<8x4xf32>
    %cst_18 = arith.constant dense<0xFF800000> : vector<8x4xf32>
    %44 = vector.multi_reduction <maximumf>, %38, %cst_18 [0] : vector<8x8x4xf32> to vector<8x4xf32>
    %45 = arith.maximumf %43, %44 : vector<8x4xf32>
    %46 = arith.subf %43, %45 : vector<8x4xf32>
    %47 = math.exp %46 : vector<8x4xf32>
    %48 = vector.shape_cast %45 : vector<8x4xf32> to vector<1x8x4xf32>
    %49 = vector.broadcast %48 : vector<1x8x4xf32> to vector<8x8x4xf32>
    %50 = arith.subf %38, %49 : vector<8x8x4xf32>
    %51 = math.exp %50 : vector<8x8x4xf32>
    %c0_19 = arith.constant 0 : index
    %c0_20 = arith.constant 0 : index
    %52 = vector.load %arg8[%c0_19, %c0_20] : memref<8x4xf32, #tpu.memory_space<vmem>>, vector<8x4xf32>
    %53 = arith.mulf %47, %52 : vector<8x4xf32>
    %cst_21 = arith.constant dense<0.000000e+00> : vector<8x4xf32>
    %54 = vector.multi_reduction <add>, %51, %cst_21 [0] : vector<8x8x4xf32> to vector<8x4xf32>
    %55 = arith.addf %53, %54 : vector<8x4xf32>
    %c0_22 = arith.constant 0 : index
    %c0_23 = arith.constant 0 : index
    %56 = vector.load %arg8[%c0_22, %c0_23] : memref<8x4xf32, #tpu.memory_space<vmem>>, vector<8x4xf32>
    tpu.vector_store %arg8[%c0_22, %c0_23], %55 {strides = array<i32>} : memref<8x4xf32, #tpu.memory_space<vmem>>, vector<8x4xf32>,
    %c0_24 = arith.constant 0 : index
    %c0_25 = arith.constant 0 : index
    %57 = vector.load %arg7[%c0_24, %c0_25] : memref<8x4xf32, #tpu.memory_space<vmem>>, vector<8x4xf32>
    tpu.vector_store %arg7[%c0_24, %c0_25], %45 {strides = array<i32>} : memref<8x4xf32, #tpu.memory_space<vmem>>, vector<8x4xf32>,
    %58 = vector.shape_cast %51 : vector<8x8x4xf32> to vector<64x4xf32>
    %cst_26 = arith.constant dense<0.000000e+00> : vector<64x128xf32>
    %59 = tpu.matmul %58, %32, %cst_26 {dimension_numbers = #tpu.dot_dimension_numbers<[1], [0], [0], [1], [0, 0, 1, 1], [], []>} : vector<64x4xf32>, vector<4x128xf32>, vector<64x128xf32> -> vector<64x128xf32>
    %60 = vector.shape_cast %59 : vector<64x128xf32> to vector<8x8x128xf32>
    %cst_27 = arith.constant dense<0.000000e+00> : vector<8x128xf32>
    %61 = tpu.matmul %47, %32, %cst_27 {dimension_numbers = #tpu.dot_dimension_numbers<[1], [0], [0], [1], [0, 0, 1, 1], [], []>} : vector<8x4xf32>, vector<4x128xf32>, vector<8x128xf32> -> vector<8x128xf32>
    %c0_28 = arith.constant 0 : index
    %c0_29 = arith.constant 0 : index
    %62 = vector.load %arg9[%c0_28, %c0_29] : memref<8x128xf32, #tpu.memory_space<vmem>>, vector<8x128xf32>
    %63 = arith.mulf %61, %62 : vector<8x128xf32>
    %64 = arith.mulf %60, %5 : vector<8x8x128xf32>
    %cst_30 = arith.constant dense<0.000000e+00> : vector<8x128xf32>
    %65 = vector.multi_reduction <add>, %64, %cst_30 [0] : vector<8x8x128xf32> to vector<8x128xf32>
    %66 = arith.addf %63, %65 : vector<8x128xf32>
    %c0_31 = arith.constant 0 : index
    %c0_32 = arith.constant 0 : index
    %67 = vector.load %arg9[%c0_31, %c0_32] : memref<8x128xf32, #tpu.memory_space<vmem>>, vector<8x128xf32>
    tpu.vector_store %arg9[%c0_31, %c0_32], %66 {strides = array<i32>} : memref<8x128xf32, #tpu.memory_space<vmem>>, vector<8x128xf32>,
    %c0_i32_33 = arith.constant 0 : i32
    %68 = arith.cmpi eq, %arg1, %c0_i32_33 : i32
    %69 = arith.extui %68 : i1 to i32
    %c0_i32_34 = arith.constant 0 : i32
    %70 = arith.cmpi ne, %69, %c0_i32_34 : i32
    scf.if %70 {
      %c0_35 = arith.constant 0 : index
      %c0_36 = arith.constant 0 : index
      %71 = vector.load %arg8[%c0_35, %c0_36] : memref<8x4xf32, #tpu.memory_space<vmem>>, vector<8x4xf32>
      %72 = tpu.reciprocal %71 {approx = true} : vector<8x4xf32> -> vector<8x4xf32>
      %c0_37 = arith.constant 0 : index
      %c0_38 = arith.constant 0 : index
      %c0_39 = arith.constant 0 : index
      %73 = vector.load %arg5[%c0_37, %c0_38, %c0_39] : memref<8x8x4xf32, #tpu.memory_space<vmem>>, vector<8x8x4xf32>
      %c0_40 = arith.constant 0 : index
      %c0_41 = arith.constant 0 : index
      %74 = vector.load %arg7[%c0_40, %c0_41] : memref<8x4xf32, #tpu.memory_space<vmem>>, vector<8x4xf32>
      %75 = vector.shape_cast %74 : vector<8x4xf32> to vector<1x8x4xf32>
      %76 = vector.broadcast %75 : vector<1x8x4xf32> to vector<8x8x4xf32>
      %77 = arith.subf %73, %76 : vector<8x8x4xf32>
      %78 = math.exp %77 : vector<8x8x4xf32>
      %79 = vector.shape_cast %72 : vector<8x4xf32> to vector<1x8x4xf32>
      %80 = vector.broadcast %79 : vector<1x8x4xf32> to vector<8x8x4xf32>
      %81 = arith.mulf %78, %80 : vector<8x8x4xf32>
      %c0_42 = arith.constant 0 : index
      %c0_43 = arith.constant 0 : index
      %c0_44 = arith.constant 0 : index
      %82 = vector.load %arg5[%c0_42, %c0_43, %c0_44] : memref<8x8x4xf32, #tpu.memory_space<vmem>>, vector<8x8x4xf32>
      tpu.vector_store %arg5[%c0_42, %c0_43, %c0_44], %81 {strides = array<i32>} : memref<8x8x4xf32, #tpu.memory_space<vmem>>, vector<8x8x4xf32>,
      %cst_45 = arith.constant dense<0.000000e+00> : vector<8x128xf32>
      %83 = tpu.matmul %72, %32, %cst_45 {dimension_numbers = #tpu.dot_dimension_numbers<[1], [0], [0], [1], [0, 0, 1, 1], [], []>} : vector<8x4xf32>, vector<4x128xf32>, vector<8x128xf32> -> vector<8x128xf32>
      %c0_46 = arith.constant 0 : index
      %c0_47 = arith.constant 0 : index
      %84 = vector.load %arg9[%c0_46, %c0_47] : memref<8x128xf32, #tpu.memory_space<vmem>>, vector<8x128xf32>
      %85 = arith.mulf %84, %83 : vector<8x128xf32>
      %c0_48 = arith.constant 0 : index
      %c0_49 = arith.constant 0 : index
      %86 = vector.load %arg6[%c0_48, %c0_49] : memref<8x128xf32, #tpu.memory_space<vmem>>, vector<8x128xf32>
      tpu.vector_store %arg6[%c0_48, %c0_49], %85 {strides = array<i32>} : memref<8x128xf32, #tpu.memory_space<vmem>>, vector<8x128xf32>,
    } else {
    }
    return
  }
  func.func @transform_0(%arg0: i32, %arg1: i32) -> (i32, i32) {
    %c0_i32 = arith.constant 0 : i32
    %c0_i32_0 = arith.constant 0 : i32
    return %arg0, %c0_i32 : i32, i32
  }
  func.func @transform_1(%arg0: i32, %arg1: i32) -> (i32, i32, i32) {
    %c0_i32 = arith.constant 0 : i32
    %c0_i32_0 = arith.constant 0 : i32
    return %arg1, %arg0, %c0_i32 : i32, i32, i32
  }
  func.func @transform_2(%arg0: i32, %arg1: i32) -> (i32, i32, i32) {
    %c0_i32 = arith.constant 0 : i32
    %c0_i32_0 = arith.constant 0 : i32
    return %arg1, %arg0, %c0_i32 : i32, i32, i32
  }
  func.func @transform_3(%arg0: i32, %arg1: i32) -> (i32, i32, i32) {
    %c0_i32 = arith.constant 0 : i32
    %c0_i32_0 = arith.constant 0 : i32
    %c0_i32_1 = arith.constant 0 : i32
    return %c0_i32, %arg0, %c0_i32_0 : i32, i32, i32
  }
  func.func @transform_4(%arg0: i32, %arg1: i32) -> (i32, i32) {
    %c0_i32 = arith.constant 0 : i32
    %c0_i32_0 = arith.constant 0 : i32
    return %arg0, %c0_i32 : i32, i32
  }
}

</mosaic_0001>

<llo_original>
// kernel: tpu_custom_call.1
$region0: #{tpu_custom_call.1}
  #allocation0 [shape = 'u32[]', space=smem, size = 0x4, offset = 0x4, fixed_abs, tag = 'smem constant byte address 0x4 - core index']
  #allocation1 [shape = 'u32[144,128]{1,0:T(1,128)}', space=vmem, size = 0x12000, scoped, tag = 'internal scratch']
  #allocation2 [shape = 'f32[8,4]{1,0:T(8,128)}', space=vmem, size = 0x1000, scoped, tag = 'scratch operand']
  #allocation3 [shape = 'f32[8,4]{1,0:T(8,128)}', space=vmem, size = 0x1000, scoped, tag = 'scratch operand']
  #allocation4 [shape = 'f32[8,128]{1,0:T(8,128)}', space=vmem, size = 0x1000, scoped, tag = 'scratch operand']
  %s0 = inlined_call_operand.hbm [shape: f32[8,128], index: 0, kind: input, shape index: {}]
  %s1 = inlined_call_operand.hbm [shape: f32[8,8,128], index: 1, kind: input, shape index: {}]
  %s2 = inlined_call_operand.hbm [shape: f32[8,8,128], index: 2, kind: input, shape index: {}]
  %s3 = inlined_call_operand.vmem [shape: f32[8,8,4], index: 3, kind: output, shape index: {0}]
  %s4 = inlined_call_operand.hbm [shape: f32[8,128], index: 4, kind: output, shape index: {1}]
  %5 = xla_tuple %s3, %s4
  %s6 = sld [smem:[#allocation0]]
  $region50: #{tpu_custom_call.1} parent=0
    _
  %s8 = ssub.s32 1, %s6
  %s9 = scalar_select 0, %s8, %s6
  $region1: #{tpu_custom_call.1} parent=0
    #allocation5 [shape = 'u8[4096]{0}', space=vmem, size = 0x1000, scoped, tag = 'input window, operand 0, single buffered']
    #allocation6 [shape = 's32[1]{0}', space=sflag, size = 0x4, scoped, tag = 'scoped memory for tpu_custom_call.1']
    #allocation7 [shape = 's32[1]{0}', space=sflag, size = 0x4, scoped, tag = 'scoped memory for tpu_custom_call.1']
    #allocation8 [shape = 'u8[32768]{0}', space=vmem, size = 0x8000, scoped, tag = 'input window, operand 1, single buffered']
    #allocation9 [shape = 's32[1]{0}', space=sflag, size = 0x4, scoped, tag = 'scoped memory for tpu_custom_call.1']
    #allocation10 [shape = 'u8[32768]{0}', space=vmem, size = 0x8000, scoped, tag = 'input window, operand 2, single buffered']
    #allocation11 [shape = 'u8[4096]{0}', space=vmem, size = 0x1000, scoped, tag = 'output window, operand 1, single buffered']
    %10 = vsyncpa [#allocation6], 0
    %11 = vsyncpa [#allocation9], 0
    %12 = vsyncpa [#allocation7], 0
    // Predicated region
    $region2: #{tpu_custom_call.1} parent=1 // pred_check
      _
    $region3: #{tpu_custom_call.1} parent=1 // pred_check_branch
      %14 = sbr.rel (0) target = $region5
    $region4: #{tpu_custom_call.1} parent=1 // pred_region
      %s16 = ssub.s32 128, 128
      %17 = vsyncadd [#allocation6], %s16
      %s19 = sshll.u32 [#allocation5], 4
      %s20 = int_to_ptr.vmem [resolvable:$true] %s19
      %22 = dma.hbm_to_vmem [thread:$0]  %s0, 128, %s20, [#allocation6]
    $region5: #{tpu_custom_call.1} parent=1 // pred_fallthru
      _
    // Predicated region
    $region6: #{tpu_custom_call.1} parent=1 // pred_check
      _
    $region7: #{tpu_custom_call.1} parent=1 // pred_check_branch
      %24 = sbr.rel (0) target = $region9
    $region8: #{tpu_custom_call.1} parent=1 // pred_region
      %s26 = ssub.s32 1024, 1024
      %27 = vsyncadd [#allocation9], %s26
      %s28 = sshll.u32 [#allocation8], 4
      %s29 = int_to_ptr.vmem [resolvable:$true] %s28
      %34 = dma.hbm_to_vmem [thread:$0]  %s1, 1024, %s29, [#allocation9], 128, 128, 8
    $region9: #{tpu_custom_call.1} parent=1 // pred_fallthru
      _
    // Predicated region
    $region10: #{tpu_custom_call.1} parent=1 // pred_check
      _
    $region11: #{tpu_custom_call.1} parent=1 // pred_check_branch
      %36 = sbr.rel (0) target = $region13
    $region12: #{tpu_custom_call.1} parent=1 // pred_region
      %s38 = ssub.s32 1024, 1024
      %39 = vsyncadd [#allocation9], %s38
      %s40 = sshll.u32 [#allocation10], 4
      %s41 = int_to_ptr.vmem [resolvable:$true] %s40
      %46 = dma.hbm_to_vmem [thread:$0]  %s2, 1024, %s41, [#allocation9], 128, 128, 8
    $region13: #{tpu_custom_call.1} parent=1 // pred_fallthru
      _
    // Predicated region
    $region14: #{tpu_custom_call.1} parent=1 // pred_check
      _
    $region15: #{tpu_custom_call.1} parent=1 // pred_check_branch
      %48 = sbr.rel (0) target = $region17
    $region16: #{tpu_custom_call.1} parent=1 // pred_region
      %49 = dma.done [#allocation6], 128
    $region17: #{tpu_custom_call.1} parent=1 // pred_fallthru
      _
    // Predicated region
    $region18: #{tpu_custom_call.1} parent=1 // pred_check
      _
    $region19: #{tpu_custom_call.1} parent=1 // pred_check_branch
      %51 = sbr.rel (0) target = $region21
    $region20: #{tpu_custom_call.1} parent=1 // pred_region
      %52 = dma.done [#allocation9], 1024
    $region21: #{tpu_custom_call.1} parent=1 // pred_fallthru
      _
    // Predicated region
    $region22: #{tpu_custom_call.1} parent=1 // pred_check
      _
    $region23: #{tpu_custom_call.1} parent=1 // pred_check_branch
      %54 = sbr.rel (0) target = $region25
    $region24: #{tpu_custom_call.1} parent=1 // pred_region
      %55 = dma.done [#allocation9], 1024
    $region25: #{tpu_custom_call.1} parent=1 // pred_fallthru
      _
    %p56 = scmp.eq.s32.totalorder 0, 0
    // Predicated region
    $region26: #{tpu_custom_call.1} parent=1 // pred_check
      %p57 = pneg %p56
    $region27: #{tpu_custom_call.1} parent=1 // pred_check_branch
      %59 = sbr.rel (%p57) target = $region29
    $region28: #{tpu_custom_call.1} parent=1 // pred_region
      %vm60 = vcmask 31744
      %61 = vst.msk [vmem:[#allocation2] sm:$0xff] %vm60, -inf
      %62 = vst.msk [vmem:[#allocation3] sm:$0xff] %vm60, 0.0
      %63 = vst [vmem:[#allocation4] sm:$0xff] 0.0
    $region29: #{tpu_custom_call.1} parent=1 // pred_fallthru
      _
    %v64 = vld [vmem:[#allocation5] sm:$0xff]
    %v65 = vld [vmem:[#allocation8] sm:$0xff]
    %v66 = vld [vmem:[#allocation8 + $0x8] sm:$0xff]
    %v67 = vld [vmem:[#allocation8 + $0x10] sm:$0xff]
    %v68 = vld [vmem:[#allocation8 + $0x18] sm:$0xff]
    %v69 = vld [vmem:[#allocation8 + $0x20] sm:$0xff]
    %v70 = vld [vmem:[#allocation8 + $0x28] sm:$0xff]
    %v71 = vld [vmem:[#allocation8 + $0x30] sm:$0xff]
    %v72 = vld [vmem:[#allocation8 + $0x38] sm:$0xff]
    %v73 = vld [vmem:[#allocation10] sm:$0xff]
    %v74 = vld [vmem:[#allocation10 + $0x8] sm:$0xff]
    %v75 = vld [vmem:[#allocation10 + $0x10] sm:$0xff]
    %v76 = vld [vmem:[#allocation10 + $0x18] sm:$0xff]
    %v77 = vld [vmem:[#allocation10 + $0x20] sm:$0xff]
    %v78 = vld [vmem:[#allocation10 + $0x28] sm:$0xff]
    %v79 = vld [vmem:[#allocation10 + $0x30] sm:$0xff]
    %v80 = vld [vmem:[#allocation10 + $0x38] sm:$0xff]
    %v81 = vlaneseq
    %v82 = vshrl.u32 %v81, 7
    %v83 = vadd.s32 %v82, 8
    %v84 = vadd.s32 %v82, 16
    %v85 = vadd.s32 %v82, 24
    %v86 = vadd.s32 %v82, 32
    %v87 = vadd.s32 %v82, 40
    %v88 = vadd.s32 %v82, 48
    %v89 = vadd.s32 %v82, 56
    %v90 = vadd.s32 %v82, 64
    %v91 = vadd.s32 %v82, 72
    %v92 = vadd.s32 %v82, 80
    %v93 = vadd.s32 %v82, 88
    %v94 = vadd.s32 %v82, 96
    %v95 = vadd.s32 %v82, 104
    %v96 = vadd.s32 %v82, 112
    %v97 = vadd.s32 %v82, 120
    %v98 = vlaneseq
    %v99 = vand.u32 %v98, 127
    %v100 = vmul.u32 %v99, 32
    %vm101 = vcmp.ge.s32.totalorder %v82, %v100
    %vm102 = vcmp.ge.s32.totalorder %v83, %v100
    %vm103 = vcmp.ge.s32.totalorder %v84, %v100
    %vm104 = vcmp.ge.s32.totalorder %v85, %v100
    %vm105 = vcmp.ge.s32.totalorder %v86, %v100
    %vm106 = vcmp.ge.s32.totalorder %v87, %v100
    %vm107 = vcmp.ge.s32.totalorder %v88, %v100
    %vm108 = vcmp.ge.s32.totalorder %v89, %v100
    %vm109 = vcmp.ge.s32.totalorder %v90, %v100
    %vm110 = vcmp.ge.s32.totalorder %v91, %v100
    %vm111 = vcmp.ge.s32.totalorder %v92, %v100
    %vm112 = vcmp.ge.s32.totalorder %v93, %v100
    %vm113 = vcmp.ge.s32.totalorder %v94, %v100
    %vm114 = vcmp.ge.s32.totalorder %v95, %v100
    %vm115 = vcmp.ge.s32.totalorder %v96, %v100
    %vm116 = vcmp.ge.s32.totalorder %v97, %v100
    %v117 = vadd.s32 %v99, 1
    %v118 = vmul.u32 %v117, 32
    %vm119 = vcmp.lt.s32.totalorder %v82, %v118
    %vm120 = vcmp.lt.s32.totalorder %v83, %v118
    %vm121 = vcmp.lt.s32.totalorder %v84, %v118
    %vm122 = vcmp.lt.s32.totalorder %v85, %v118
    %vm123 = vcmp.lt.s32.totalorder %v86, %v118
    %vm124 = vcmp.lt.s32.totalorder %v87, %v118
    %vm125 = vcmp.lt.s32.totalorder %v88, %v118
    %vm126 = vcmp.lt.s32.totalorder %v89, %v118
    %vm127 = vcmp.lt.s32.totalorder %v90, %v118
    %vm128 = vcmp.lt.s32.totalorder %v91, %v118
    %vm129 = vcmp.lt.s32.totalorder %v92, %v118
    %vm130 = vcmp.lt.s32.totalorder %v93, %v118
    %vm131 = vcmp.lt.s32.totalorder %v94, %v118
    %vm132 = vcmp.lt.s32.totalorder %v95, %v118
    %vm133 = vcmp.lt.s32.totalorder %v96, %v118
    %vm134 = vcmp.lt.s32.totalorder %v97, %v118
    %vm135 = vmand %vm101, %vm119
    %vm136 = vmand %vm102, %vm120
    %vm137 = vmand %vm103, %vm121
    %vm138 = vmand %vm104, %vm122
    %vm139 = vmand %vm105, %vm123
    %vm140 = vmand %vm106, %vm124
    %vm141 = vmand %vm107, %vm125
    %vm142 = vmand %vm108, %vm126
    %vm143 = vmand %vm109, %vm127
    %vm144 = vmand %vm110, %vm128
    %vm145 = vmand %vm111, %vm129
    %vm146 = vmand %vm112, %vm130
    %vm147 = vmand %vm113, %vm131
    %vm148 = vmand %vm114, %vm132
    %vm149 = vmand %vm115, %vm133
    %vm150 = vmand %vm116, %vm134
    %v151 = vsel %vm135, 0.17677669, 0.0
    %v152 = vsel %vm136, 0.17677669, 0.0
    %v153 = vsel %vm137, 0.17677669, 0.0
    %v154 = vsel %vm138, 0.17677669, 0.0
    %v155 = vsel %vm139, 0.17677669, 0.0
    %v156 = vsel %vm140, 0.17677669, 0.0
    %v157 = vsel %vm141, 0.17677669, 0.0
    %v158 = vsel %vm142, 0.17677669, 0.0
    %v159 = vsel %vm143, 0.17677669, 0.0
    %v160 = vsel %vm144, 0.17677669, 0.0
    %v161 = vsel %vm145, 0.17677669, 0.0
    %v162 = vsel %vm146, 0.17677669, 0.0
    %v163 = vsel %vm147, 0.17677669, 0.0
    %v164 = vsel %vm148, 0.17677669, 0.0
    %v165 = vsel %vm149, 0.17677669, 0.0
    %v166 = vsel %vm150, 0.17677669, 0.0
    %v167 = vmul.u32 %v82, 32
    %vm168 = vcmp.ge.s32.totalorder %v99, %v167
    %v169 = vadd.s32 %v82, 1
    %v170 = vmul.u32 %v169, 32
    %vm171 = vcmp.lt.s32.totalorder %v99, %v170
    %vm172 = vmand %vm168, %vm171
    %v173 = vsel %vm172, 1, 0
    %v174 = vcvt.s32.f32 %v173
    %v175 = vmul.f32 %v64, %v65
    %v176 = vmul.f32 %v64, %v66
    %v177 = vmul.f32 %v64, %v67
    %v178 = vmul.f32 %v64, %v68
    %v179 = vmul.f32 %v64, %v69
    %v180 = vmul.f32 %v64, %v70
    %v181 = vmul.f32 %v64, %v71
    %v182 = vmul.f32 %v64, %v72
    %183 = vmatprep.subr.mxu0 0.0
    %184 = vmatpush1.msra.mxu0 %v151
    %185 = vmatprep.subr.mxu0 0.0
    %186 = vmatpush1.msra.mxu0 %v152
    %187 = vmatprep.subr.mxu0 0.0
    %188 = vmatpush1.msra.mxu0 %v153
    %189 = vmatprep.subr.mxu0 0.0
    %190 = vmatpush1.msra.mxu0 %v154
    %191 = vmatprep.subr.mxu0 0.0
    %192 = vmatpush1.msra.mxu0 %v155
    %193 = vmatprep.subr.mxu0 0.0
    %194 = vmatpush1.msra.mxu0 %v156
    %195 = vmatprep.subr.mxu0 0.0
    %196 = vmatpush1.msra.mxu0 %v157
    %197 = vmatprep.subr.mxu0 0.0
    %198 = vmatpush1.msra.mxu0 %v158
    %199 = vmatprep.subr.mxu0 0.0
    %200 = vmatpush1.msra.mxu0 %v159
    %201 = vmatprep.subr.mxu0 0.0
    %202 = vmatpush1.msra.mxu0 %v160
    %203 = vmatprep.subr.mxu0 0.0
    %204 = vmatpush1.msra.mxu0 %v161
    %205 = vmatprep.subr.mxu0 0.0
    %206 = vmatpush1.msra.mxu0 %v162
    %207 = vmatprep.subr.mxu0 0.0
    %208 = vmatpush1.msra.mxu0 %v163
    %209 = vmatprep.subr.mxu0 0.0
    %210 = vmatpush1.msra.mxu0 %v164
    %211 = vmatprep.subr.mxu0 0.0
    %212 = vmatpush1.msra.mxu0 %v165
    %213 = vmatprep.subr.mxu0 0.0
    %214 = vmatpush1.msra.mxu0 %v166
    %215 = vmatprep.subr.mxu0 0.0
    %216 = vmatpush1.msra.mxu0 0.0
    %217 = vmatprep.subr.mxu0 0.0
    %218 = vmatpush1.msra.mxu0 0.0
    %219 = vmatprep.subr.mxu0 0.0
    %220 = vmatpush1.msra.mxu0 0.0
    %221 = vmatprep.subr.mxu0 0.0
    %222 = vmatpush1.msra.mxu0 0.0
    %223 = vmatprep.subr.mxu0 0.0
    %224 = vmatpush1.msra.mxu0 0.0
    %225 = vmatprep.subr.mxu0 0.0
    %226 = vmatpush1.msra.mxu0 0.0
    %227 = vmatprep.subr.mxu0 0.0
    %228 = vmatpush1.msra.mxu0 0.0
    %229 = vmatprep.subr.mxu0 0.0
    %230 = vmatpush1.msra.mxu0 0.0
    %231 = vmatprep.subr.mxu0 0.0
    %232 = vmatpush1.msra.mxu0 0.0
    %233 = vmatprep.subr.mxu0 0.0
    %234 = vmatpush1.msra.mxu0 0.0
    %235 = vmatprep.subr.mxu0 0.0
    %236 = vmatpush1.msra.mxu0 0.0
    %237 = vmatprep.subr.mxu0 0.0
    %238 = vmatpush1.msra.mxu0 0.0
    %239 = vmatprep.subr.mxu0 0.0
    %240 = vmatpush1.msra.mxu0 0.0
    %241 = vmatprep.subr.mxu0 0.0
    %242 = vmatpush1.msra.mxu0 0.0
    %243 = vmatprep.subr.mxu0 0.0
    %244 = vmatpush1.msra.mxu0 0.0
    %245 = vmatprep.subr.mxu0 0.0
    %246 = vmatpush1.msra.mxu0 0.0
    %247 = vmatprep.mubr.f32.mxu0 0.0
    %248 = vmatmul.mubr.f32.gmra.mrb[0].mxu0 %v175
    %v249 = vpop.f32.mrb[0].mxu0
    %v250 = vadd.f32 0.0, %v249
    %v251 = vpop.f32.mrb[0].mxu0
    %252 = vmatprep.mubr.f32.mxu0 0.0
    %253 = vmatmul.mubr.f32.gmra.mrb[0].mxu0 %v176
    %v254 = vpop.f32.mrb[0].mxu0
    %v255 = vadd.f32 0.0, %v254
    %v256 = vpop.f32.mrb[0].mxu0
    %257 = vmatprep.mubr.f32.mxu0 0.0
    %258 = vmatmul.mubr.f32.gmra.mrb[0].mxu0 %v177
    %v259 = vpop.f32.mrb[0].mxu0
    %v260 = vadd.f32 0.0, %v259
    %v261 = vpop.f32.mrb[0].mxu0
    %262 = vmatprep.mubr.f32.mxu0 0.0
    %263 = vmatmul.mubr.f32.gmra.mrb[0].mxu0 %v178
    %v264 = vpop.f32.mrb[0].mxu0
    %v265 = vadd.f32 0.0, %v264
    %v266 = vpop.f32.mrb[0].mxu0
    %267 = vmatprep.mubr.f32.mxu0 0.0
    %268 = vmatmul.mubr.f32.gmra.mrb[0].mxu0 %v179
    %v269 = vpop.f32.mrb[0].mxu0
    %v270 = vadd.f32 0.0, %v269
    %v271 = vpop.f32.mrb[0].mxu0
    %272 = vmatprep.mubr.f32.mxu0 0.0
    %273 = vmatmul.mubr.f32.gmra.mrb[0].mxu0 %v180
    %v274 = vpop.f32.mrb[0].mxu0
    %v275 = vadd.f32 0.0, %v274
    %v276 = vpop.f32.mrb[0].mxu0
    %277 = vmatprep.mubr.f32.mxu0 0.0
    %278 = vmatmul.mubr.f32.gmra.mrb[0].mxu0 %v181
    %v279 = vpop.f32.mrb[0].mxu0
    %v280 = vadd.f32 0.0, %v279
    %v281 = vpop.f32.mrb[0].mxu0
    %282 = vmatprep.mubr.f32.mxu0 0.0
    %283 = vmatmul.mubr.f32.gmra.mrb[0].mxu0 %v182
    %v284 = vpop.f32.mrb[0].mxu0
    %v285 = vadd.f32 0.0, %v284
    %v286 = vpop.f32.mrb[0].mxu0
    %287 = vdwg.mxu0
    %s288 = smul.u32 0, 8
    %s289 = smul.u32 %s288, 8
    %s290 = scalar_lea.vmem %s3, %s289
    %vm291 = vcmask 31744
    %292 = vst.msk [vmem:[%s290] sm:$0xff] %vm291, %v250
    %293 = vst.msk [vmem:[%s290 + $0x8] sm:$0xff] %vm291, %v255
    %294 = vst.msk [vmem:[%s290 + $0x10] sm:$0xff] %vm291, %v260
    %295 = vst.msk [vmem:[%s290 + $0x18] sm:$0xff] %vm291, %v265
    %296 = vst.msk [vmem:[%s290 + $0x20] sm:$0xff] %vm291, %v270
    %297 = vst.msk [vmem:[%s290 + $0x28] sm:$0xff] %vm291, %v275
    %298 = vst.msk [vmem:[%s290 + $0x30] sm:$0xff] %vm291, %v280
    %299 = vst.msk [vmem:[%s290 + $0x38] sm:$0xff] %vm291, %v285
    %v300 = vld [vmem:[#allocation2] sm:$0xff]
    %v301 = vsel %vm291, %v250, -inf
    %v302 = vsel %vm291, %v255, -inf
    %v303 = vsel %vm291, %v260, -inf
    %v304 = vsel %vm291, %v265, -inf
    %v305 = vsel %vm291, %v270, -inf
    %v306 = vmax.f32 %v301, %v305
    %v307 = vsel %vm291, %v275, -inf
    %v308 = vmax.f32 %v302, %v307
    %v309 = vsel %vm291, %v280, -inf
    %v310 = vmax.f32 %v303, %v309
    %v311 = vsel %vm291, %v285, -inf
    %v312 = vmax.f32 %v304, %v311
    %v313 = vmax.f32 %v306, %v308
    %v314 = vmax.f32 %v310, %v312
    %v315 = vmax.f32 %v313, %v314
    %v316 = vmax.f32 %v300, %v315
    %v317 = vsub.f32 %v300, %v316
    %v318 = vmul.f32 %v317, 1.442695
    %v319 = vpow.pop %v318
    %v320 = vsub.f32 %v250, %v316
    %v321 = vsub.f32 %v255, %v316
    %v322 = vsub.f32 %v260, %v316
    %v323 = vsub.f32 %v265, %v316
    %v324 = vsub.f32 %v270, %v316
    %v325 = vsub.f32 %v275, %v316
    %v326 = vsub.f32 %v280, %v316
    %v327 = vsub.f32 %v285, %v316
    %v328 = vmul.f32 %v320, 1.442695
    %v329 = vpow.pop %v328
    %v330 = vmul.f32 %v321, 1.442695
    %v331 = vpow.pop %v330
    %v332 = vmul.f32 %v322, 1.442695
    %v333 = vpow.pop %v332
    %v334 = vmul.f32 %v323, 1.442695
    %v335 = vpow.pop %v334
    %v336 = vmul.f32 %v324, 1.442695
    %v337 = vpow.pop %v336
    %v338 = vmul.f32 %v325, 1.442695
    %v339 = vpow.pop %v338
    %v340 = vmul.f32 %v326, 1.442695
    %v341 = vpow.pop %v340
    %v342 = vmul.f32 %v327, 1.442695
    %v343 = vpow.pop %v342
    %v344 = vld [vmem:[#allocation3] sm:$0xff]
    %v345 = vmul.f32 %v319, %v344
    %v346 = vsel %vm291, %v329, 0.0
    %v347 = vsel %vm291, %v331, 0.0
    %v348 = vadd.f32 %v346, %v347
    %v349 = vsel %vm291, %v333, 0.0
    %v350 = vadd.f32 %v348, %v349
    %v351 = vsel %vm291, %v335, 0.0
    %v352 = vadd.f32 %v350, %v351
    %v353 = vsel %vm291, %v337, 0.0
    %v354 = vadd.f32 %v352, %v353
    %v355 = vsel %vm291, %v339, 0.0
    %v356 = vadd.f32 %v354, %v355
    %v357 = vsel %vm291, %v341, 0.0
    %v358 = vadd.f32 %v356, %v357
    %v359 = vsel %vm291, %v343, 0.0
    %v360 = vadd.f32 %v358, %v359
    %v361 = vadd.f32 %v345, %v360
    %362 = vst.msk [vmem:[#allocation3] sm:$0xff] %vm291, %v361
    %363 = vst.msk [vmem:[#allocation2] sm:$0xff] %vm291, %v316
    %v365 = vsel %vm291, %v329, 0
    %v368 = vsel %vm291, %v331, 0
    %v371 = vsel %vm291, %v333, 0
    %v374 = vsel %vm291, %v335, 0
    %v377 = vsel %vm291, %v337, 0
    %v380 = vsel %vm291, %v339, 0
    %v383 = vsel %vm291, %v341, 0
    %v386 = vsel %vm291, %v343, 0
    %vm388 = vcmask 1043456
    %v390 = vsel %vm388, %v174, 0
    %392 = vmatprep.subr.mxu0 0.0
    %393 = vmatpush1.msra.mxu0 %v390
    %394 = vmatprep.subr.mxu0 0.0
    %395 = vmatpush1.msra.mxu0 0.0
    %396 = vmatprep.subr.mxu0 0.0
    %397 = vmatpush1.msra.mxu0 0.0
    %398 = vmatprep.subr.mxu0 0.0
    %399 = vmatpush1.msra.mxu0 0.0
    %400 = vmatprep.subr.mxu0 0.0
    %401 = vmatpush1.msra.mxu0 0.0
    %402 = vmatprep.subr.mxu0 0.0
    %403 = vmatpush1.msra.mxu0 0.0
    %404 = vmatprep.subr.mxu0 0.0
    %405 = vmatpush1.msra.mxu0 0.0
    %406 = vmatprep.subr.mxu0 0.0
    %407 = vmatpush1.msra.mxu0 0.0
    %408 = vmatprep.subr.mxu0 0.0
    %409 = vmatpush1.msra.mxu0 0.0
    %410 = vmatprep.subr.mxu0 0.0
    %411 = vmatpush1.msra.mxu0 0.0
    %412 = vmatprep.subr.mxu0 0.0
    %413 = vmatpush1.msra.mxu0 0.0
    %414 = vmatprep.subr.mxu0 0.0
    %415 = vmatpush1.msra.mxu0 0.0
    %416 = vmatprep.subr.mxu0 0.0
    %417 = vmatpush1.msra.mxu0 0.0
    %418 = vmatprep.subr.mxu0 0.0
    %419 = vmatpush1.msra.mxu0 0.0
    %420 = vmatprep.subr.mxu0 0.0
    %421 = vmatpush1.msra.mxu0 0.0
    %422 = vmatprep.subr.mxu0 0.0
    %423 = vmatpush1.msra.mxu0 0.0
    %424 = vmatprep.subr.mxu0 0.0
    %425 = vmatpush1.msra.mxu0 0.0
    %426 = vmatprep.subr.mxu0 0.0
    %427 = vmatpush1.msra.mxu0 0.0
    %428 = vmatprep.subr.mxu0 0.0
    %429 = vmatpush1.msra.mxu0 0.0
    %430 = vmatprep.subr.mxu0 0.0
    %431 = vmatpush1.msra.mxu0 0.0
    %432 = vmatprep.subr.mxu0 0.0
    %433 = vmatpush1.msra.mxu0 0.0
    %434 = vmatprep.subr.mxu0 0.0
    %435 = vmatpush1.msra.mxu0 0.0
    %436 = vmatprep.subr.mxu0 0.0
    %437 = vmatpush1.msra.mxu0 0.0
    %438 = vmatprep.subr.mxu0 0.0
    %439 = vmatpush1.msra.mxu0 0.0
    %440 = vmatprep.subr.mxu0 0.0
    %441 = vmatpush1.msra.mxu0 0.0
    %442 = vmatprep.subr.mxu0 0.0
    %443 = vmatpush1.msra.mxu0 0.0
    %444 = vmatprep.subr.mxu0 0.0
    %445 = vmatpush1.msra.mxu0 0.0
    %446 = vmatprep.subr.mxu0 0.0
    %447 = vmatpush1.msra.mxu0 0.0
    %448 = vmatprep.subr.mxu0 0.0
    %449 = vmatpush1.msra.mxu0 0.0
    %450 = vmatprep.subr.mxu0 0.0
    %451 = vmatpush1.msra.mxu0 0.0
    %452 = vmatprep.subr.mxu0 0.0
    %453 = vmatpush1.msra.mxu0 0.0
    %454 = vmatprep.subr.mxu0 0.0
    %455 = vmatpush1.msra.mxu0 0.0
    %456 = vmatprep.mubr.f32.mxu0 0.0
    %457 = vmatmul.mubr.f32.gmra.mrb[0].mxu0 %v365
    %v458 = vpop.f32.mrb[0].mxu0
    %v459 = vadd.f32 0.0, %v458
    %v460 = vpop.f32.mrb[0].mxu0
    %461 = vmatprep.mubr.f32.mxu0 0.0
    %462 = vmatmul.mubr.f32.gmra.mrb[0].mxu0 %v368
    %v463 = vpop.f32.mrb[0].mxu0
    %v464 = vadd.f32 0.0, %v463
    %v465 = vpop.f32.mrb[0].mxu0
    %466 = vmatprep.mubr.f32.mxu0 0.0
    %467 = vmatmul.mubr.f32.gmra.mrb[0].mxu0 %v371
    %v468 = vpop.f32.mrb[0].mxu0
    %v469 = vadd.f32 0.0, %v468
    %v470 = vpop.f32.mrb[0].mxu0
    %471 = vmatprep.mubr.f32.mxu0 0.0
    %472 = vmatmul.mubr.f32.gmra.mrb[0].mxu0 %v374
    %v473 = vpop.f32.mrb[0].mxu0
    %v474 = vadd.f32 0.0, %v473
    %v475 = vpop.f32.mrb[0].mxu0
    %476 = vmatprep.mubr.f32.mxu0 0.0
    %477 = vmatmul.mubr.f32.gmra.mrb[0].mxu0 %v377
    %v478 = vpop.f32.mrb[0].mxu0
    %v479 = vadd.f32 0.0, %v478
    %v480 = vpop.f32.mrb[0].mxu0
    %481 = vmatprep.mubr.f32.mxu0 0.0
    %482 = vmatmul.mubr.f32.gmra.mrb[0].mxu0 %v380
    %v483 = vpop.f32.mrb[0].mxu0
    %v484 = vadd.f32 0.0, %v483
    %v485 = vpop.f32.mrb[0].mxu0
    %486 = vmatprep.mubr.f32.mxu0 0.0
    %487 = vmatmul.mubr.f32.gmra.mrb[0].mxu0 %v383
    %v488 = vpop.f32.mrb[0].mxu0
    %v489 = vadd.f32 0.0, %v488
    %v490 = vpop.f32.mrb[0].mxu0
    %491 = vmatprep.mubr.f32.mxu0 0.0
    %492 = vmatmul.mubr.f32.gmra.mrb[0].mxu0 %v386
    %v493 = vpop.f32.mrb[0].mxu0
    %v494 = vadd.f32 0.0, %v493
    %v495 = vpop.f32.mrb[0].mxu0
    %496 = vdwg.mxu0
    %v498 = vsel %vm291, %v319, 0
    %500 = vmatprep.subr.mxu0 0.0
    %501 = vmatpush1.msra.mxu0 %v390
    %502 = vmatprep.subr.mxu0 0.0
    %503 = vmatpush1.msra.mxu0 0.0
    %504 = vmatprep.subr.mxu0 0.0
    %505 = vmatpush1.msra.mxu0 0.0
    %506 = vmatprep.subr.mxu0 0.0
    %507 = vmatpush1.msra.mxu0 0.0
    %508 = vmatprep.subr.mxu0 0.0
    %509 = vmatpush1.msra.mxu0 0.0
    %510 = vmatprep.subr.mxu0 0.0
    %511 = vmatpush1.msra.mxu0 0.0
    %512 = vmatprep.subr.mxu0 0.0
    %513 = vmatpush1.msra.mxu0 0.0
    %514 = vmatprep.subr.mxu0 0.0
    %515 = vmatpush1.msra.mxu0 0.0
    %516 = vmatprep.subr.mxu0 0.0
    %517 = vmatpush1.msra.mxu0 0.0
    %518 = vmatprep.subr.mxu0 0.0
    %519 = vmatpush1.msra.mxu0 0.0
    %520 = vmatprep.subr.mxu0 0.0
    %521 = vmatpush1.msra.mxu0 0.0
    %522 = vmatprep.subr.mxu0 0.0
    %523 = vmatpush1.msra.mxu0 0.0
    %524 = vmatprep.subr.mxu0 0.0
    %525 = vmatpush1.msra.mxu0 0.0
    %526 = vmatprep.subr.mxu0 0.0
    %527 = vmatpush1.msra.mxu0 0.0
    %528 = vmatprep.subr.mxu0 0.0
    %529 = vmatpush1.msra.mxu0 0.0
    %530 = vmatprep.subr.mxu0 0.0
    %531 = vmatpush1.msra.mxu0 0.0
    %532 = vmatprep.subr.mxu0 0.0
    %533 = vmatpush1.msra.mxu0 0.0
    %534 = vmatprep.subr.mxu0 0.0
    %535 = vmatpush1.msra.mxu0 0.0
    %536 = vmatprep.subr.mxu0 0.0
    %537 = vmatpush1.msra.mxu0 0.0
    %538 = vmatprep.subr.mxu0 0.0
    %539 = vmatpush1.msra.mxu0 0.0
    %540 = vmatprep.subr.mxu0 0.0
    %541 = vmatpush1.msra.mxu0 0.0
    %542 = vmatprep.subr.mxu0 0.0
    %543 = vmatpush1.msra.mxu0 0.0
    %544 = vmatprep.subr.mxu0 0.0
    %545 = vmatpush1.msra.mxu0 0.0
    %546 = vmatprep.subr.mxu0 0.0
    %547 = vmatpush1.msra.mxu0 0.0
    %548 = vmatprep.subr.mxu0 0.0
    %549 = vmatpush1.msra.mxu0 0.0
    %550 = vmatprep.subr.mxu0 0.0
    %551 = vmatpush1.msra.mxu0 0.0
    %552 = vmatprep.subr.mxu0 0.0
    %553 = vmatpush1.msra.mxu0 0.0
    %554 = vmatprep.subr.mxu0 0.0
    %555 = vmatpush1.msra.mxu0 0.0
    %556 = vmatprep.subr.mxu0 0.0
    %557 = vmatpush1.msra.mxu0 0.0
    %558 = vmatprep.subr.mxu0 0.0
    %559 = vmatpush1.msra.mxu0 0.0
    %560 = vmatprep.subr.mxu0 0.0
    %561 = vmatpush1.msra.mxu0 0.0
    %562 = vmatprep.subr.mxu0 0.0
    %563 = vmatpush1.msra.mxu0 0.0
    %564 = vmatprep.mubr.f32.mxu0 0.0
    %565 = vmatmul.mubr.f32.gmra.mrb[0].mxu0 %v498
    %v566 = vpop.f32.mrb[0].mxu0
    %v567 = vadd.f32 0.0, %v566
    %v568 = vpop.f32.mrb[0].mxu0
    %569 = vdwg.mxu0
    %v570 = vld [vmem:[#allocation4] sm:$0xff]
    %v571 = vmul.f32 %v567, %v570
    %v572 = vmul.f32 %v459, %v73
    %v573 = vmul.f32 %v464, %v74
    %v574 = vmul.f32 %v469, %v75
    %v575 = vmul.f32 %v474, %v76
    %v576 = vmul.f32 %v479, %v77
    %v577 = vmul.f32 %v484, %v78
    %v578 = vmul.f32 %v489, %v79
    %v579 = vmul.f32 %v494, %v80
    %v580 = vadd.f32 %v572, %v573
    %v581 = vadd.f32 %v580, %v574
    %v582 = vadd.f32 %v581, %v575
    %v583 = vadd.f32 %v582, %v576
    %v584 = vadd.f32 %v583, %v577
    %v585 = vadd.f32 %v584, %v578
    %v586 = vadd.f32 %v585, %v579
    %v587 = vadd.f32 %v571, %v586
    %588 = vst [vmem:[#allocation4] sm:$0xff] %v587
    // Predicated region
    $region30: #{tpu_custom_call.1} parent=1 // pred_check
      %p589 = pneg %p56
    $region31: #{tpu_custom_call.1} parent=1 // pred_check_branch
      %591 = sbr.rel (%p589) target = $region33
    $region32: #{tpu_custom_call.1} parent=1 // pred_region
      %v592 = vld [vmem:[#allocation3] sm:$0xff]
      %v593 = vrcp.pop %v592
      %v594 = vld [vmem:[%s3] sm:$0xff]
      %v595 = vld [vmem:[%s3 + $0x8] sm:$0xff]
      %v596 = vld [vmem:[%s3 + $0x10] sm:$0xff]
      %v597 = vld [vmem:[%s3 + $0x18] sm:$0xff]
      %v598 = vld [vmem:[%s3 + $0x20] sm:$0xff]
      %v599 = vld [vmem:[%s3 + $0x28] sm:$0xff]
      %v600 = vld [vmem:[%s3 + $0x30] sm:$0xff]
      %v601 = vld [vmem:[%s3 + $0x38] sm:$0xff]
      %v602 = vld [vmem:[#allocation2] sm:$0xff]
      %v603 = vsub.f32 %v594, %v602
      %v604 = vsub.f32 %v595, %v602
      %v605 = vsub.f32 %v596, %v602
      %v606 = vsub.f32 %v597, %v602
      %v607 = vsub.f32 %v598, %v602
      %v608 = vsub.f32 %v599, %v602
      %v609 = vsub.f32 %v600, %v602
      %v610 = vsub.f32 %v601, %v602
      %v611 = vmul.f32 %v603, 1.442695
      %v612 = vpow.pop %v611
      %v613 = vmul.f32 %v604, 1.442695
      %v614 = vpow.pop %v613
      %v615 = vmul.f32 %v605, 1.442695
      %v616 = vpow.pop %v615
      %v617 = vmul.f32 %v606, 1.442695
      %v618 = vpow.pop %v617
      %v619 = vmul.f32 %v607, 1.442695
      %v620 = vpow.pop %v619
      %v621 = vmul.f32 %v608, 1.442695
      %v622 = vpow.pop %v621
      %v623 = vmul.f32 %v609, 1.442695
      %v624 = vpow.pop %v623
      %v625 = vmul.f32 %v610, 1.442695
      %v626 = vpow.pop %v625
      %v627 = vmul.f32 %v612, %v593
      %v628 = vmul.f32 %v614, %v593
      %v629 = vmul.f32 %v616, %v593
      %v630 = vmul.f32 %v618, %v593
      %v631 = vmul.f32 %v620, %v593
      %v632 = vmul.f32 %v622, %v593
      %v633 = vmul.f32 %v624, %v593
      %v634 = vmul.f32 %v626, %v593
      %635 = vst.msk [vmem:[%s3] sm:$0xff] %vm291, %v627
      %636 = vst.msk [vmem:[%s3 + $0x8] sm:$0xff] %vm291, %v628
      %637 = vst.msk [vmem:[%s3 + $0x10] sm:$0xff] %vm291, %v629
      %638 = vst.msk [vmem:[%s3 + $0x18] sm:$0xff] %vm291, %v630
      %639 = vst.msk [vmem:[%s3 + $0x20] sm:$0xff] %vm291, %v631
      %640 = vst.msk [vmem:[%s3 + $0x28] sm:$0xff] %vm291, %v632
      %641 = vst.msk [vmem:[%s3 + $0x30] sm:$0xff] %vm291, %v633
      %642 = vst.msk [vmem:[%s3 + $0x38] sm:$0xff] %vm291, %v634
      %v644 = vsel %vm291, %v593, 0
      %646 = vmatprep.subr.mxu0 0.0
      %647 = vmatpush1.msra.mxu0 %v390
      %648 = vmatprep.subr.mxu0 0.0
      %649 = vmatpush1.msra.mxu0 0.0
      %650 = vmatprep.subr.mxu0 0.0
      %651 = vmatpush1.msra.mxu0 0.0
      %652 = vmatprep.subr.mxu0 0.0
      %653 = vmatpush1.msra.mxu0 0.0
      %654 = vmatprep.subr.mxu0 0.0
      %655 = vmatpush1.msra.mxu0 0.0
      %656 = vmatprep.subr.mxu0 0.0
      %657 = vmatpush1.msra.mxu0 0.0
      %658 = vmatprep.subr.mxu0 0.0
      %659 = vmatpush1.msra.mxu0 0.0
      %660 = vmatprep.subr.mxu0 0.0
      %661 = vmatpush1.msra.mxu0 0.0
      %662 = vmatprep.subr.mxu0 0.0
      %663 = vmatpush1.msra.mxu0 0.0
      %664 = vmatprep.subr.mxu0 0.0
      %665 = vmatpush1.msra.mxu0 0.0
      %666 = vmatprep.subr.mxu0 0.0
      %667 = vmatpush1.msra.mxu0 0.0
      %668 = vmatprep.subr.mxu0 0.0
      %669 = vmatpush1.msra.mxu0 0.0
      %670 = vmatprep.subr.mxu0 0.0
      %671 = vmatpush1.msra.mxu0 0.0
      %672 = vmatprep.subr.mxu0 0.0
      %673 = vmatpush1.msra.mxu0 0.0
      %674 = vmatprep.subr.mxu0 0.0
      %675 = vmatpush1.msra.mxu0 0.0
      %676 = vmatprep.subr.mxu0 0.0
      %677 = vmatpush1.msra.mxu0 0.0
      %678 = vmatprep.subr.mxu0 0.0
      %679 = vmatpush1.msra.mxu0 0.0
      %680 = vmatprep.subr.mxu0 0.0
      %681 = vmatpush1.msra.mxu0 0.0
      %682 = vmatprep.subr.mxu0 0.0
      %683 = vmatpush1.msra.mxu0 0.0
      %684 = vmatprep.subr.mxu0 0.0
      %685 = vmatpush1.msra.mxu0 0.0
      %686 = vmatprep.subr.mxu0 0.0
      %687 = vmatpush1.msra.mxu0 0.0
      %688 = vmatprep.subr.mxu0 0.0
      %689 = vmatpush1.msra.mxu0 0.0
      %690 = vmatprep.subr.mxu0 0.0
      %691 = vmatpush1.msra.mxu0 0.0
      %692 = vmatprep.subr.mxu0 0.0
      %693 = vmatpush1.msra.mxu0 0.0
      %694 = vmatprep.subr.mxu0 0.0
      %695 = vmatpush1.msra.mxu0 0.0
      %696 = vmatprep.subr.mxu0 0.0
      %697 = vmatpush1.msra.mxu0 0.0
      %698 = vmatprep.subr.mxu0 0.0
      %699 = vmatpush1.msra.mxu0 0.0
      %700 = vmatprep.subr.mxu0 0.0
      %701 = vmatpush1.msra.mxu0 0.0
      %702 = vmatprep.subr.mxu0 0.0
      %703 = vmatpush1.msra.mxu0 0.0
      %704 = vmatprep.subr.mxu0 0.0
      %705 = vmatpush1.msra.mxu0 0.0
      %706 = vmatprep.subr.mxu0 0.0
      %707 = vmatpush1.msra.mxu0 0.0
      %708 = vmatprep.subr.mxu0 0.0
      %709 = vmatpush1.msra.mxu0 0.0
      %710 = vmatprep.mubr.f32.mxu0 0.0
      %711 = vmatmul.mubr.f32.gmra.mrb[0].mxu0 %v644
      %v712 = vpop.f32.mrb[0].mxu0
      %v713 = vadd.f32 0.0, %v712
      %v714 = vpop.f32.mrb[0].mxu0
      %715 = vdwg.mxu0
      %v716 = vld [vmem:[#allocation4] sm:$0xff]
      %v717 = vmul.f32 %v716, %v713
      %718 = vst [vmem:[#allocation11] sm:$0xff] %v717
    $region33: #{tpu_custom_call.1} parent=1 // pred_fallthru
      _
    // Predicated region
    $region34: #{tpu_custom_call.1} parent=1 // pred_check
      _
    $region35: #{tpu_custom_call.1} parent=1 // pred_check_branch
      %720 = sbr.rel (0) target = $region37
    $region36: #{tpu_custom_call.1} parent=1 // pred_region
      _
    $region37: #{tpu_custom_call.1} parent=1 // pred_fallthru
      _
    // Predicated region
    $region38: #{tpu_custom_call.1} parent=1 // pred_check
      _
    $region39: #{tpu_custom_call.1} parent=1 // pred_check_branch
      %722 = sbr.rel (0) target = $region41
    $region40: #{tpu_custom_call.1} parent=1 // pred_region
      %s724 = ssub.s32 128, 128
      %725 = vsyncadd [#allocation7], %s724
      %s727 = sshll.u32 [#allocation11], 4
      %s728 = int_to_ptr.vmem [resolvable:$true] %s727
      %730 = dma.vmem_to_hbm [thread:$0]  %s728, 128, %s4, [#allocation7]
    $region41: #{tpu_custom_call.1} parent=1 // pred_fallthru
      _
    // Predicated region
    $region42: #{tpu_custom_call.1} parent=1 // pred_check
      _
    $region43: #{tpu_custom_call.1} parent=1 // pred_check_branch
      %732 = sbr.rel (0) target = $region45
    $region44: #{tpu_custom_call.1} parent=1 // pred_region
      _
    $region45: #{tpu_custom_call.1} parent=1 // pred_fallthru
      _
    // Predicated region
    $region46: #{tpu_custom_call.1} parent=1 // pred_check
      _
    $region47: #{tpu_custom_call.1} parent=1 // pred_check_branch
      %734 = sbr.rel (0) target = $region49
    $region48: #{tpu_custom_call.1} parent=1 // pred_region
      %735 = dma.done [#allocation7], 128
    $region49: #{tpu_custom_call.1} parent=1 // pred_fallthru
      _
    %736 = vsyncpa [#allocation6], 1
    %737 = vsyncpa [#allocation9], 1
    %738 = vsyncpa [#allocation7], 1

</llo_original>
